<compile_context>
chip_gen: v7x
topology: tpu7x:2x2x1
jax: 0.10.0
libtpu: 0.0.40
codegen_flags: <defaults>
</compile_context>

<pallas_src>
import functools

import jax
import jax.numpy as jnp
from jax.experimental import pallas as pl
from jax.experimental.pallas import tpu as pltpu


def _next_word_kernel(idx_ref,    # VMEM (T*B, 1) int32, t-major token ids
                      emb_ref,    # VMEM (vocab, emb_dim) bf16
                      w1_ref,     # VMEM (block_size*emb_dim, hidden) bf16
                      b1_ref,     # VMEM (1, hidden) f32
                      w2_ref,     # VMEM (hidden, TN) bf16  (vocab tile)
                      b2_ref,     # VMEM (1, TN) f32        (vocab tile)
                      o_ref,      # VMEM (B, TN) f32        (vocab tile)
                      h_ref):     # VMEM (B, hidden) bf16   persistent scratch
    j = pl.program_id(0)

    # ---- gather + lin1 + tanh: computed once, cached in h_ref -------------
    @pl.when(j == 0)
    def _():
        TB = idx_ref.shape[0]
        vocab, emb_dim = emb_ref.shape
        flat, hidden = w1_ref.shape
        T = flat // emb_dim
        B = TB // T

        # One-hot MXU gather: rows are t-major, so rows [t*B:(t+1)*B] hold the
        # embeddings of position t for the whole batch.
        iota = jax.lax.broadcasted_iota(jnp.int32, (TB, vocab), 1)
        one_hot = (iota == idx_ref[...]).astype(jnp.bfloat16)
        xg = jnp.dot(one_hot, emb_ref[...],
                     preferred_element_type=jnp.float32)        # (T*B, emb_dim)

        # lin1 with the flatten folded in:
        #   x_flat @ W1 == sum_t emb[idx[:, t]] @ W1[t*E:(t+1)*E, :]
        w1 = w1_ref[...]
        acc = jnp.zeros((B, hidden), jnp.float32)
        for t in range(T):                                      # static unroll
            x_t = xg[t * B:(t + 1) * B, :].astype(jnp.bfloat16)
            acc += jnp.dot(x_t, w1[t * emb_dim:(t + 1) * emb_dim, :],
                           preferred_element_type=jnp.float32)
        h_ref[...] = jnp.tanh(acc + b1_ref[...]).astype(h_ref.dtype)

    # ---- lin2 on this vocab tile ------------------------------------------
    logits = jnp.dot(h_ref[...], w2_ref[...],
                     preferred_element_type=jnp.float32)
    o_ref[...] = (logits + b2_ref[...]).astype(o_ref.dtype)


@functools.partial(jax.jit, static_argnames=("tn",))
def next_word_forward(idx, emb_w, w1, b1, w2, b2, *, tn=2048):
    """Forward pass of NextWord.

    idx:   (B, block_size) int32 token ids
    emb_w: (vocab, emb_dim)
    w1:    (block_size*emb_dim, hidden),  b1: (hidden,)
    w2:    (hidden, vocab),               b2: (vocab,)
    returns logits (B, vocab) float32
    """
    B, T = idx.shape
    vocab, emb_dim = emb_w.shape
    flat = T * emb_dim
    hidden = w1.shape[1]
    assert w1.shape == (flat, hidden)
    assert w2.shape == (hidden, vocab)

    # Lane-dense vocab tiling; pad the vocab so it divides evenly and slice
    # the padded logits off before returning.
    vocab_128 = ((vocab + 127) // 128) * 128
    tn = min(tn, vocab_128)
    vocab_pad = ((vocab + tn - 1) // tn) * tn
    n_tiles = vocab_pad // tn

    # bf16 params: native MXU operand format, half the weight DMA bytes.
    # (astype is a no-op when the caller already stores bf16 params.)
    emb_bf16 = emb_w.astype(jnp.bfloat16)
    w1_bf16 = w1.astype(jnp.bfloat16)
    w2_bf16 = w2.astype(jnp.bfloat16)
    b1_2d = b1.reshape(1, hidden).astype(jnp.float32)
    b2_2d = b2.reshape(1, vocab).astype(jnp.float32)
    if vocab_pad != vocab:
        w2_bf16 = jnp.pad(w2_bf16, ((0, 0), (0, vocab_pad - vocab)))
        b2_2d = jnp.pad(b2_2d, ((0, 0), (0, vocab_pad - vocab)))

    # Token ids flattened t-major so the gathered rows of position t form a
    # contiguous (B, emb_dim) block inside the kernel.
    idx_tmajor = idx.astype(jnp.int32).T.reshape(T * B, 1)

    # TODO(synk): for realistic vocab sizes keep the embedding table in HBM
    # (memory_space=pl.ANY) with a manual make_async_copy row gather instead
    # of a VMEM-resident block + one-hot matmul.
    # TODO(synk): on v7x (2 TensorCores) use a 2-D grid (2, n_tiles//2) with
    # dimension_semantics=("parallel", "arbitrary") and gate the h compute on
    # pl.program_id(1) == 0 to recover megacore sharding of the vocab tiles.
    grid_spec = pltpu.PrefetchScalarGridSpec(
        num_scalar_prefetch=0,
        grid=(n_tiles,),
        in_specs=[
            pl.BlockSpec((T * B, 1),       lambda j: (0, 0)),
            pl.BlockSpec((vocab, emb_dim), lambda j: (0, 0)),
            pl.BlockSpec((flat, hidden),   lambda j: (0, 0)),
            pl.BlockSpec((1, hidden),      lambda j: (0, 0)),
            # If the w2-tile DMA ever becomes exposed at large TN, add
            # pipeline_mode=pl.Buffered(3) on the two specs below.
            pl.BlockSpec((hidden, tn),     lambda j: (0, j)),
            pl.BlockSpec((1, tn),          lambda j: (0, j)),
        ],
        out_specs=pl.BlockSpec((B, tn), lambda j: (0, j)),
        scratch_shapes=[pltpu.VMEM((B, hidden), jnp.bfloat16)],
    )

    out = pl.pallas_call(
        _next_word_kernel,
        out_shape=jax.ShapeDtypeStruct((B, vocab_pad), jnp.float32),
        grid_spec=grid_spec,
        compiler_params=pltpu.CompilerParams(
            # "arbitrary": h is computed at j == 0 and reused by later tiles.
            dimension_semantics=("arbitrary",),
            vmem_limit_bytes=32 * 1024 * 1024,   # safe on v5e/v6e/v7x
        ),
    )(idx_tmajor, emb_bf16, w1_bf16, b1_2d, w2_bf16, b2_2d)

    return out[:, :vocab]


def _reference_forward(idx, emb_w, w1, b1, w2, b2):
    # Reference with the SAME bf16 matmul-operand casts as the kernel
    # (f32 accumulation, f32 bias/tanh) so the comparison is tight.
    x = jnp.take(emb_w.astype(jnp.bfloat16).astype(jnp.float32), idx,
                 axis=0).reshape(idx.shape[0], -1)
    h = jnp.dot(x.astype(jnp.bfloat16), w1.astype(jnp.bfloat16),
                preferred_element_type=jnp.float32)
    h = jnp.tanh(h + b1)
    logits = jnp.dot(h.astype(jnp.bfloat16), w2.astype(jnp.bfloat16),
                     preferred_element_type=jnp.float32)
    return logits + b2


if __name__ == "__main__":
    # Small shapes consistent with the module.
    B = 8
    block_size = 8
    vocab_size = 256
    emb_dim = 16
    hidden_size = 128

    key = jax.random.PRNGKey(0)
    k_idx, k_emb, k_w1, k_b1, k_w2, k_b2 = jax.random.split(key, 6)

    idx = jax.random.randint(k_idx, (B, block_size), 0, vocab_size,
                             dtype=jnp.int32)

    # Deterministic parameter init (shapes per NextWord.__init__).
    emb_w = jax.random.normal(k_emb, (vocab_size, emb_dim), dtype=jnp.float32)
    fan_in1 = block_size * emb_dim
    bound1 = 1.0 / (fan_in1 ** 0.5)
    w1 = jax.random.uniform(k_w1, (fan_in1, hidden_size), jnp.float32,
                            -bound1, bound1)
    b1 = jax.random.uniform(k_b1, (hidden_size,), jnp.float32, -bound1, bound1)
    bound2 = 1.0 / (hidden_size ** 0.5)
    w2 = jax.random.uniform(k_w2, (hidden_size, vocab_size), jnp.float32,
                            -bound2, bound2)
    b2 = jax.random.uniform(k_b2, (vocab_size,), jnp.float32, -bound2, bound2)

    # Cast weights/embedding to bf16 once, "at parameter-load time".
    emb_w_p = emb_w.astype(jnp.bfloat16)
    w1_p = w1.astype(jnp.bfloat16)
    w2_p = w2.astype(jnp.bfloat16)

    out = next_word_forward(idx, emb_w_p, w1_p, b1, w2_p, b2)
    out = jax.block_until_ready(out)

    ref = _reference_forward(idx, emb_w, w1, b1, w2, b2)
    assert out.shape == (B, vocab_size)
    max_err = float(jnp.max(jnp.abs(out - ref)))
    assert jnp.allclose(out, ref, atol=3e-3, rtol=3e-3), max_err

    print("KERNEL_OK")
</pallas_src>

<mosaic_0001>
module attributes {stable_mosaic.version = 11 : i64} {
  func.func @_next_word_kernel(%arg0: i32, %arg1: memref<64x1xi32, #tpu.memory_space<vmem>>, %arg2: memref<256x16xbf16, #tpu.memory_space<vmem>>, %arg3: memref<128x128xbf16, #tpu.memory_space<vmem>>, %arg4: memref<1x128xf32, #tpu.memory_space<vmem>>, %arg5: memref<128x256xbf16, #tpu.memory_space<vmem>>, %arg6: memref<1x256xf32, #tpu.memory_space<vmem>>, %arg7: memref<8x256xf32, #tpu.memory_space<vmem>>, %arg8: memref<8x128xbf16, #tpu.memory_space<vmem>>) attributes {dimension_semantics = [#tpu.dimension_semantics<arbitrary>], iteration_bounds = array<i64: 1>, scalar_prefetch = 0 : i64, scratch_operands = 1 : i64, tpu.core_type = #tpu.core_type<tc>, window_params = [{pipeline_mode = #tpu.pipeline_mode<synchronous>, transform_indices = @transform_0, window_bounds = array<i64: 64, 1>}, {pipeline_mode = #tpu.pipeline_mode<synchronous>, transform_indices = @transform_1, window_bounds = array<i64: 256, 16>}, {pipeline_mode = #tpu.pipeline_mode<synchronous>, transform_indices = @transform_2, window_bounds = array<i64: 128, 128>}, {pipeline_mode = #tpu.pipeline_mode<synchronous>, transform_indices = @transform_3, window_bounds = array<i64: 1, 128>}, {transform_indices = @transform_4, window_bounds = array<i64: 128, 256>}, {transform_indices = @transform_5, window_bounds = array<i64: 1, 256>}, {transform_indices = @transform_6, window_bounds = array<i64: 8, 256>}]} {
    %c0_i32 = arith.constant 0 : i32
    %0 = arith.cmpi eq, %arg0, %c0_i32 : i32
    %1 = arith.extui %0 : i1 to i32
    %c0_i32_0 = arith.constant 0 : i32
    %2 = arith.cmpi ne, %1, %c0_i32_0 : i32
    scf.if %2 {
      %10 = tpu.iota {dimensions = array<i32: 1>} : vector<64x256xi32>
      %c0_8 = arith.constant 0 : index
      %c0_9 = arith.constant 0 : index
      %11 = vector.load %arg1[%c0_8, %c0_9] : memref<64x1xi32, #tpu.memory_space<vmem>>, vector<64x1xi32>
      %12 = vector.broadcast %11 : vector<64x1xi32> to vector<64x256xi32>
      %13 = arith.cmpi eq, %10, %12 : vector<64x256xi32>
      %14 = arith.extui %13 : vector<64x256xi1> to vector<64x256xi32>
      %15 = arith.sitofp %14 : vector<64x256xi32> to vector<64x256xf32>
      %16 = arith.truncf %15 : vector<64x256xf32> to vector<64x256xbf16>
      %c0_10 = arith.constant 0 : index
      %c0_11 = arith.constant 0 : index
      %17 = vector.load %arg2[%c0_10, %c0_11] : memref<256x16xbf16, #tpu.memory_space<vmem>>, vector<256x16xbf16>
      %cst_12 = arith.constant dense<0.000000e+00> : vector<64x16xf32>
      %18 = tpu.matmul %16, %17, %cst_12 {dimension_numbers = #tpu.dot_dimension_numbers<[1], [0], [0], [1], [0, 0, 1, 1], [], []>} : vector<64x256xbf16>, vector<256x16xbf16>, vector<64x16xf32> -> vector<64x16xf32>
      %c0_13 = arith.constant 0 : index
      %c0_14 = arith.constant 0 : index
      %19 = vector.load %arg3[%c0_13, %c0_14] : memref<128x128xbf16, #tpu.memory_space<vmem>>, vector<128x128xbf16>
      %cst_15 = arith.constant 0.000000e+00 : f32
      %20 = vector.broadcast %cst_15 : f32 to vector<8x128xf32>
      %21 = vector.extract_strided_slice %18 {offsets = [0, 0], sizes = [8, 16], strides = [1, 1]} : vector<64x16xf32> to vector<8x16xf32>
      %22 = arith.truncf %21 : vector<8x16xf32> to vector<8x16xbf16>
      %23 = vector.extract_strided_slice %19 {offsets = [0, 0], sizes = [16, 128], strides = [1, 1]} : vector<128x128xbf16> to vector<16x128xbf16>
      %cst_16 = arith.constant dense<0.000000e+00> : vector<8x128xf32>
      %24 = tpu.matmul %22, %23, %cst_16 {dimension_numbers = #tpu.dot_dimension_numbers<[1], [0], [0], [1], [0, 0, 1, 1], [], []>} : vector<8x16xbf16>, vector<16x128xbf16>, vector<8x128xf32> -> vector<8x128xf32>
      %25 = arith.addf %20, %24 : vector<8x128xf32>
      %26 = vector.extract_strided_slice %18 {offsets = [8, 0], sizes = [8, 16], strides = [1, 1]} : vector<64x16xf32> to vector<8x16xf32>
      %27 = arith.truncf %26 : vector<8x16xf32> to vector<8x16xbf16>
      %28 = vector.extract_strided_slice %19 {offsets = [16, 0], sizes = [16, 128], strides = [1, 1]} : vector<128x128xbf16> to vector<16x128xbf16>
      %cst_17 = arith.constant dense<0.000000e+00> : vector<8x128xf32>
      %29 = tpu.matmul %27, %28, %cst_17 {dimension_numbers = #tpu.dot_dimension_numbers<[1], [0], [0], [1], [0, 0, 1, 1], [], []>} : vector<8x16xbf16>, vector<16x128xbf16>, vector<8x128xf32> -> vector<8x128xf32>
      %30 = arith.addf %25, %29 : vector<8x128xf32>
      %31 = vector.extract_strided_slice %18 {offsets = [16, 0], sizes = [8, 16], strides = [1, 1]} : vector<64x16xf32> to vector<8x16xf32>
      %32 = arith.truncf %31 : vector<8x16xf32> to vector<8x16xbf16>
      %33 = vector.extract_strided_slice %19 {offsets = [32, 0], sizes = [16, 128], strides = [1, 1]} : vector<128x128xbf16> to vector<16x128xbf16>
      %cst_18 = arith.constant dense<0.000000e+00> : vector<8x128xf32>
      %34 = tpu.matmul %32, %33, %cst_18 {dimension_numbers = #tpu.dot_dimension_numbers<[1], [0], [0], [1], [0, 0, 1, 1], [], []>} : vector<8x16xbf16>, vector<16x128xbf16>, vector<8x128xf32> -> vector<8x128xf32>
      %35 = arith.addf %30, %34 : vector<8x128xf32>
      %36 = vector.extract_strided_slice %18 {offsets = [24, 0], sizes = [8, 16], strides = [1, 1]} : vector<64x16xf32> to vector<8x16xf32>
      %37 = arith.truncf %36 : vector<8x16xf32> to vector<8x16xbf16>
      %38 = vector.extract_strided_slice %19 {offsets = [48, 0], sizes = [16, 128], strides = [1, 1]} : vector<128x128xbf16> to vector<16x128xbf16>
      %cst_19 = arith.constant dense<0.000000e+00> : vector<8x128xf32>
      %39 = tpu.matmul %37, %38, %cst_19 {dimension_numbers = #tpu.dot_dimension_numbers<[1], [0], [0], [1], [0, 0, 1, 1], [], []>} : vector<8x16xbf16>, vector<16x128xbf16>, vector<8x128xf32> -> vector<8x128xf32>
      %40 = arith.addf %35, %39 : vector<8x128xf32>
      %41 = vector.extract_strided_slice %18 {offsets = [32, 0], sizes = [8, 16], strides = [1, 1]} : vector<64x16xf32> to vector<8x16xf32>
      %42 = arith.truncf %41 : vector<8x16xf32> to vector<8x16xbf16>
      %43 = vector.extract_strided_slice %19 {offsets = [64, 0], sizes = [16, 128], strides = [1, 1]} : vector<128x128xbf16> to vector<16x128xbf16>
      %cst_20 = arith.constant dense<0.000000e+00> : vector<8x128xf32>
      %44 = tpu.matmul %42, %43, %cst_20 {dimension_numbers = #tpu.dot_dimension_numbers<[1], [0], [0], [1], [0, 0, 1, 1], [], []>} : vector<8x16xbf16>, vector<16x128xbf16>, vector<8x128xf32> -> vector<8x128xf32>
      %45 = arith.addf %40, %44 : vector<8x128xf32>
      %46 = vector.extract_strided_slice %18 {offsets = [40, 0], sizes = [8, 16], strides = [1, 1]} : vector<64x16xf32> to vector<8x16xf32>
      %47 = arith.truncf %46 : vector<8x16xf32> to vector<8x16xbf16>
      %48 = vector.extract_strided_slice %19 {offsets = [80, 0], sizes = [16, 128], strides = [1, 1]} : vector<128x128xbf16> to vector<16x128xbf16>
      %cst_21 = arith.constant dense<0.000000e+00> : vector<8x128xf32>
      %49 = tpu.matmul %47, %48, %cst_21 {dimension_numbers = #tpu.dot_dimension_numbers<[1], [0], [0], [1], [0, 0, 1, 1], [], []>} : vector<8x16xbf16>, vector<16x128xbf16>, vector<8x128xf32> -> vector<8x128xf32>
      %50 = arith.addf %45, %49 : vector<8x128xf32>
      %51 = vector.extract_strided_slice %18 {offsets = [48, 0], sizes = [8, 16], strides = [1, 1]} : vector<64x16xf32> to vector<8x16xf32>
      %52 = arith.truncf %51 : vector<8x16xf32> to vector<8x16xbf16>
      %53 = vector.extract_strided_slice %19 {offsets = [96, 0], sizes = [16, 128], strides = [1, 1]} : vector<128x128xbf16> to vector<16x128xbf16>
      %cst_22 = arith.constant dense<0.000000e+00> : vector<8x128xf32>
      %54 = tpu.matmul %52, %53, %cst_22 {dimension_numbers = #tpu.dot_dimension_numbers<[1], [0], [0], [1], [0, 0, 1, 1], [], []>} : vector<8x16xbf16>, vector<16x128xbf16>, vector<8x128xf32> -> vector<8x128xf32>
      %55 = arith.addf %50, %54 : vector<8x128xf32>
      %56 = vector.extract_strided_slice %18 {offsets = [56, 0], sizes = [8, 16], strides = [1, 1]} : vector<64x16xf32> to vector<8x16xf32>
      %57 = arith.truncf %56 : vector<8x16xf32> to vector<8x16xbf16>
      %58 = vector.extract_strided_slice %19 {offsets = [112, 0], sizes = [16, 128], strides = [1, 1]} : vector<128x128xbf16> to vector<16x128xbf16>
      %cst_23 = arith.constant dense<0.000000e+00> : vector<8x128xf32>
      %59 = tpu.matmul %57, %58, %cst_23 {dimension_numbers = #tpu.dot_dimension_numbers<[1], [0], [0], [1], [0, 0, 1, 1], [], []>} : vector<8x16xbf16>, vector<16x128xbf16>, vector<8x128xf32> -> vector<8x128xf32>
      %60 = arith.addf %55, %59 : vector<8x128xf32>
      %c0_24 = arith.constant 0 : index
      %c0_25 = arith.constant 0 : index
      %61 = vector.load %arg4[%c0_24, %c0_25] : memref<1x128xf32, #tpu.memory_space<vmem>>, vector<1x128xf32>
      %62 = vector.broadcast %61 : vector<1x128xf32> to vector<8x128xf32>
      %63 = arith.addf %60, %62 : vector<8x128xf32>
      %64 = math.tanh %63 : vector<8x128xf32>
      %65 = arith.truncf %64 : vector<8x128xf32> to vector<8x128xbf16>
      %c0_26 = arith.constant 0 : index
      %c0_27 = arith.constant 0 : index
      %66 = vector.load %arg8[%c0_26, %c0_27] : memref<8x128xbf16, #tpu.memory_space<vmem>>, vector<8x128xbf16>
      tpu.vector_store %arg8[%c0_26, %c0_27], %65 {strides = array<i32>} : memref<8x128xbf16, #tpu.memory_space<vmem>>, vector<8x128xbf16>,
    } else {
    }
    %c0 = arith.constant 0 : index
    %c0_1 = arith.constant 0 : index
    %3 = vector.load %arg8[%c0, %c0_1] : memref<8x128xbf16, #tpu.memory_space<vmem>>, vector<8x128xbf16>
    %c0_2 = arith.constant 0 : index
    %c0_3 = arith.constant 0 : index
    %4 = vector.load %arg5[%c0_2, %c0_3] : memref<128x256xbf16, #tpu.memory_space<vmem>>, vector<128x256xbf16>
    %cst = arith.constant dense<0.000000e+00> : vector<8x256xf32>
    %5 = tpu.matmul %3, %4, %cst {dimension_numbers = #tpu.dot_dimension_numbers<[1], [0], [0], [1], [0, 0, 1, 1], [], []>} : vector<8x128xbf16>, vector<128x256xbf16>, vector<8x256xf32> -> vector<8x256xf32>
    %c0_4 = arith.constant 0 : index
    %c0_5 = arith.constant 0 : index
    %6 = vector.load %arg6[%c0_4, %c0_5] : memref<1x256xf32, #tpu.memory_space<vmem>>, vector<1x256xf32>
    %7 = vector.broadcast %6 : vector<1x256xf32> to vector<8x256xf32>
    %8 = arith.addf %5, %7 : vector<8x256xf32>
    %c0_6 = arith.constant 0 : index
    %c0_7 = arith.constant 0 : index
    %9 = vector.load %arg7[%c0_6, %c0_7] : memref<8x256xf32, #tpu.memory_space<vmem>>, vector<8x256xf32>
    tpu.vector_store %arg7[%c0_6, %c0_7], %8 {strides = array<i32>} : memref<8x256xf32, #tpu.memory_space<vmem>>, vector<8x256xf32>,
    return
  }
  func.func @transform_0(%arg0: i32) -> (i32, i32) {
    %c0_i32 = arith.constant 0 : i32
    %c0_i32_0 = arith.constant 0 : i32
    %c0_i32_1 = arith.constant 0 : i32
    return %c0_i32, %c0_i32_0 : i32, i32
  }
  func.func @transform_1(%arg0: i32) -> (i32, i32) {
    %c0_i32 = arith.constant 0 : i32
    %c0_i32_0 = arith.constant 0 : i32
    %c0_i32_1 = arith.constant 0 : i32
    return %c0_i32, %c0_i32_0 : i32, i32
  }
  func.func @transform_2(%arg0: i32) -> (i32, i32) {
    %c0_i32 = arith.constant 0 : i32
    %c0_i32_0 = arith.constant 0 : i32
    %c0_i32_1 = arith.constant 0 : i32
    return %c0_i32, %c0_i32_0 : i32, i32
  }
  func.func @transform_3(%arg0: i32) -> (i32, i32) {
    %c0_i32 = arith.constant 0 : i32
    %c0_i32_0 = arith.constant 0 : i32
    %c0_i32_1 = arith.constant 0 : i32
    return %c0_i32, %c0_i32_0 : i32, i32
  }
  func.func @transform_4(%arg0: i32) -> (i32, i32) {
    %c0_i32 = arith.constant 0 : i32
    %c0_i32_0 = arith.constant 0 : i32
    return %c0_i32, %arg0 : i32, i32
  }
  func.func @transform_5(%arg0: i32) -> (i32, i32) {
    %c0_i32 = arith.constant 0 : i32
    %c0_i32_0 = arith.constant 0 : i32
    return %c0_i32, %arg0 : i32, i32
  }
  func.func @transform_6(%arg0: i32) -> (i32, i32) {
    %c0_i32 = arith.constant 0 : i32
    %c0_i32_0 = arith.constant 0 : i32
    return %c0_i32, %arg0 : i32, i32
  }
}

</mosaic_0001>

<llo_original>
// kernel: next_word_forward.1
$region0: #{next_word_forward.1}
  #allocation0 [shape = 'u32[]', space=smem, size = 0x4, offset = 0x4, fixed_abs, tag = 'smem constant byte address 0x4 - core index']
  #allocation1 [shape = 'u32[144,128]{1,0:T(1,128)}', space=vmem, size = 0x12000, scoped, tag = 'internal scratch']
  #allocation2 [shape = 'bf16[8,128]{1,0:T(8,128)(2,1)}', space=vmem, size = 0x800, scoped, tag = 'scratch operand']
  %s0 = inlined_call_operand.vmem [shape: s32[64,1], index: 0, kind: input, shape index: {}]
  %s1 = inlined_call_operand.vmem [shape: bf16[256,16], index: 1, kind: input, shape index: {}]
  %s2 = inlined_call_operand.vmem [shape: bf16[128,128], index: 2, kind: input, shape index: {}]
  %s3 = inlined_call_operand.vmem [shape: f32[1,128], index: 3, kind: input, shape index: {}]
  %s4 = inlined_call_operand.vmem [shape: bf16[128,256], index: 4, kind: input, shape index: {}]
  %s5 = inlined_call_operand.vmem [shape: f32[1,256], index: 5, kind: input, shape index: {}]
  %s6 = inlined_call_operand.hbm [shape: f32[8,256], index: 6, kind: output, shape index: {}]
  %s7 = sld [smem:[#allocation0]]
  $region38: #{next_word_forward.1} parent=0
    _
  %s9 = ssub.s32 1, %s7
  %s10 = scalar_select 0, %s9, %s7
  $region1: #{next_word_forward.1} parent=0
    #allocation3 [shape = 'u8[8192]{0}', space=vmem, size = 0x2000, scoped, tag = 'output window, operand 0, single buffered']
    #allocation4 [shape = 's32[1]{0}', space=sflag, size = 0x4, scoped, tag = 'scoped memory for next_word_forward.1']
    %11 = vsyncpa [#allocation4], 0
    // Predicated region
    $region2: #{next_word_forward.1} parent=1 // pred_check
      _
    $region3: #{next_word_forward.1} parent=1 // pred_check_branch
      %13 = sbr.rel (0) target = $region5
    $region4: #{next_word_forward.1} parent=1 // pred_region
      _
    $region5: #{next_word_forward.1} parent=1 // pred_fallthru
      _
    // Predicated region
    $region6: #{next_word_forward.1} parent=1 // pred_check
      _
    $region7: #{next_word_forward.1} parent=1 // pred_check_branch
      %15 = sbr.rel (0) target = $region9
    $region8: #{next_word_forward.1} parent=1 // pred_region
      _
    $region9: #{next_word_forward.1} parent=1 // pred_fallthru
      _
    // Predicated region
    $region10: #{next_word_forward.1} parent=1 // pred_check
      _
    $region11: #{next_word_forward.1} parent=1 // pred_check_branch
      %17 = sbr.rel (0) target = $region13
    $region12: #{next_word_forward.1} parent=1 // pred_region
      _
    $region13: #{next_word_forward.1} parent=1 // pred_fallthru
      _
    // Predicated region
    $region14: #{next_word_forward.1} parent=1 // pred_check
      _
    $region15: #{next_word_forward.1} parent=1 // pred_check_branch
      %19 = sbr.rel (0) target = $region17
    $region16: #{next_word_forward.1} parent=1 // pred_region
      _
    $region17: #{next_word_forward.1} parent=1 // pred_fallthru
      _
    // Predicated region
    $region18: #{next_word_forward.1} parent=1 // pred_check
      _
    $region19: #{next_word_forward.1} parent=1 // pred_check_branch
      %21 = sbr.rel (0) target = $region21
    $region20: #{next_word_forward.1} parent=1 // pred_region
      _
    $region21: #{next_word_forward.1} parent=1 // pred_fallthru
      _
    // Predicated region
    $region22: #{next_word_forward.1} parent=1 // pred_check
      _
    $region23: #{next_word_forward.1} parent=1 // pred_check_branch
      %23 = sbr.rel (0) target = $region25
    $region24: #{next_word_forward.1} parent=1 // pred_region
      _
    $region25: #{next_word_forward.1} parent=1 // pred_fallthru
      _
    %p25 = scmp.eq.s32.totalorder 0, 0
    // Predicated region
    $region26: #{next_word_forward.1} parent=1 // pred_check
      %p26 = pneg %p25
    $region27: #{next_word_forward.1} parent=1 // pred_check_branch
      %28 = sbr.rel (%p26) target = $region29
    $region28: #{next_word_forward.1} parent=1 // pred_region
      %v29 = vlaneseq
      %v30 = vand.u32 %v29, 127
      %v31 = vadd.s32 %v30, 128
      %v32 = vld [vmem:[%s0] sm:$0xff]
      %v33 = vld [vmem:[%s0 + $0x8] sm:$0xff]
      %v34 = vld [vmem:[%s0 + $0x10] sm:$0xff]
      %v35 = vld [vmem:[%s0 + $0x18] sm:$0xff]
      %v36 = vld [vmem:[%s0 + $0x20] sm:$0xff]
      %v37 = vld [vmem:[%s0 + $0x28] sm:$0xff]
      %v38 = vld [vmem:[%s0 + $0x30] sm:$0xff]
      %v39 = vld [vmem:[%s0 + $0x38] sm:$0xff]
      %40 = vset.pattern.permute.xlu0 0
      %41 = vperm.xlu0 %40, %v32
      %v42 = vpop.permute.xlu0 %41
      %43 = vset.pattern.permute.xlu0 0
      %44 = vperm.xlu0 %43, %v33
      %v45 = vpop.permute.xlu0 %44
      %46 = vset.pattern.permute.xlu0 0
      %47 = vperm.xlu0 %46, %v34
      %v48 = vpop.permute.xlu0 %47
      %49 = vset.pattern.permute.xlu0 0
      %50 = vperm.xlu0 %49, %v35
      %v51 = vpop.permute.xlu0 %50
      %52 = vset.pattern.permute.xlu0 0
      %53 = vperm.xlu0 %52, %v36
      %v54 = vpop.permute.xlu0 %53
      %55 = vset.pattern.permute.xlu0 0
      %56 = vperm.xlu0 %55, %v37
      %v57 = vpop.permute.xlu0 %56
      %58 = vset.pattern.permute.xlu0 0
      %59 = vperm.xlu0 %58, %v38
      %v60 = vpop.permute.xlu0 %59
      %61 = vset.pattern.permute.xlu0 0
      %62 = vperm.xlu0 %61, %v39
      %v63 = vpop.permute.xlu0 %62
      %vm64 = vcmp.eq.s32.totalorder %v30, %v42
      %vm65 = vcmp.eq.s32.totalorder %v31, %v42
      %vm66 = vcmp.eq.s32.totalorder %v30, %v45
      %vm67 = vcmp.eq.s32.totalorder %v31, %v45
      %vm68 = vcmp.eq.s32.totalorder %v30, %v48
      %vm69 = vcmp.eq.s32.totalorder %v31, %v48
      %vm70 = vcmp.eq.s32.totalorder %v30, %v51
      %vm71 = vcmp.eq.s32.totalorder %v31, %v51
      %vm72 = vcmp.eq.s32.totalorder %v30, %v54
      %vm73 = vcmp.eq.s32.totalorder %v31, %v54
      %vm74 = vcmp.eq.s32.totalorder %v30, %v57
      %vm75 = vcmp.eq.s32.totalorder %v31, %v57
      %vm76 = vcmp.eq.s32.totalorder %v30, %v60
      %vm77 = vcmp.eq.s32.totalorder %v31, %v60
      %vm78 = vcmp.eq.s32.totalorder %v30, %v63
      %vm79 = vcmp.eq.s32.totalorder %v31, %v63
      %v80 = vsel %vm64, 1, 0
      %v81 = vsel %vm65, 1, 0
      %v82 = vsel %vm66, 1, 0
      %v83 = vsel %vm67, 1, 0
      %v84 = vsel %vm68, 1, 0
      %v85 = vsel %vm69, 1, 0
      %v86 = vsel %vm70, 1, 0
      %v87 = vsel %vm71, 1, 0
      %v88 = vsel %vm72, 1, 0
      %v89 = vsel %vm73, 1, 0
      %v90 = vsel %vm74, 1, 0
      %v91 = vsel %vm75, 1, 0
      %v92 = vsel %vm76, 1, 0
      %v93 = vsel %vm77, 1, 0
      %v94 = vsel %vm78, 1, 0
      %v95 = vsel %vm79, 1, 0
      %v96 = vcvt.s32.f32 %v80
      %v97 = vcvt.s32.f32 %v81
      %v98 = vcvt.s32.f32 %v82
      %v99 = vcvt.s32.f32 %v83
      %v100 = vcvt.s32.f32 %v84
      %v101 = vcvt.s32.f32 %v85
      %v102 = vcvt.s32.f32 %v86
      %v103 = vcvt.s32.f32 %v87
      %v104 = vcvt.s32.f32 %v88
      %v105 = vcvt.s32.f32 %v89
      %v106 = vcvt.s32.f32 %v90
      %v107 = vcvt.s32.f32 %v91
      %v108 = vcvt.s32.f32 %v92
      %v109 = vcvt.s32.f32 %v93
      %v110 = vcvt.s32.f32 %v94
      %v111 = vcvt.s32.f32 %v95
      %v112 = vpack.c.bf16 %v98, %v96
      %v113 = vpack.c.bf16 %v99, %v97
      %v114 = vpack.c.bf16 %v102, %v100
      %v115 = vpack.c.bf16 %v103, %v101
      %v116 = vpack.c.bf16 %v106, %v104
      %v117 = vpack.c.bf16 %v107, %v105
      %v118 = vpack.c.bf16 %v110, %v108
      %v119 = vpack.c.bf16 %v111, %v109
      %v120 = vld [vmem:[%s1] sm:$0xf]
      %v121 = vld [vmem:[%s1 + $0x4] sm:$0xf]
      %v122 = vld [vmem:[%s1 + $0x8] sm:$0xf]
      %v123 = vld [vmem:[%s1 + $0xc] sm:$0xf]
      %v124 = vld [vmem:[%s1 + $0x10] sm:$0xf]
      %v125 = vld [vmem:[%s1 + $0x14] sm:$0xf]
      %v126 = vld [vmem:[%s1 + $0x18] sm:$0xf]
      %v127 = vld [vmem:[%s1 + $0x1c] sm:$0xf]
      %v128 = vld [vmem:[%s1 + $0x20] sm:$0xf]
      %v129 = vld [vmem:[%s1 + $0x24] sm:$0xf]
      %v130 = vld [vmem:[%s1 + $0x28] sm:$0xf]
      %v131 = vld [vmem:[%s1 + $0x2c] sm:$0xf]
      %v132 = vld [vmem:[%s1 + $0x30] sm:$0xf]
      %v133 = vld [vmem:[%s1 + $0x34] sm:$0xf]
      %v134 = vld [vmem:[%s1 + $0x38] sm:$0xf]
      %v135 = vld [vmem:[%s1 + $0x3c] sm:$0xf]
      %v136 = vld [vmem:[%s1 + $0x40] sm:$0xf]
      %v137 = vld [vmem:[%s1 + $0x44] sm:$0xf]
      %v138 = vld [vmem:[%s1 + $0x48] sm:$0xf]
      %v139 = vld [vmem:[%s1 + $0x4c] sm:$0xf]
      %v140 = vld [vmem:[%s1 + $0x50] sm:$0xf]
      %v141 = vld [vmem:[%s1 + $0x54] sm:$0xf]
      %v142 = vld [vmem:[%s1 + $0x58] sm:$0xf]
      %v143 = vld [vmem:[%s1 + $0x5c] sm:$0xf]
      %v144 = vld [vmem:[%s1 + $0x60] sm:$0xf]
      %v145 = vld [vmem:[%s1 + $0x64] sm:$0xf]
      %v146 = vld [vmem:[%s1 + $0x68] sm:$0xf]
      %v147 = vld [vmem:[%s1 + $0x6c] sm:$0xf]
      %v148 = vld [vmem:[%s1 + $0x70] sm:$0xf]
      %v149 = vld [vmem:[%s1 + $0x74] sm:$0xf]
      %v150 = vld [vmem:[%s1 + $0x78] sm:$0xf]
      %v151 = vld [vmem:[%s1 + $0x7c] sm:$0xf]
      %v184 = vunpack.c.l.b16 %v120
      %v185 = vunpack.c.l.b16 %v121
      %v186 = vunpack.c.l.b16 %v122
      %v187 = vunpack.c.l.b16 %v123
      %v188 = vunpack.c.l.b16 %v124
      %v189 = vunpack.c.l.b16 %v125
      %v190 = vunpack.c.l.b16 %v126
      %v191 = vunpack.c.l.b16 %v127
      %v192 = vunpack.c.l.b16 %v128
      %v193 = vunpack.c.l.b16 %v129
      %v194 = vunpack.c.l.b16 %v130
      %v195 = vunpack.c.l.b16 %v131
      %v196 = vunpack.c.l.b16 %v132
      %v197 = vunpack.c.l.b16 %v133
      %v198 = vunpack.c.l.b16 %v134
      %v199 = vunpack.c.l.b16 %v135
      %v200 = vunpack.c.l.b16 %v136
      %v201 = vunpack.c.l.b16 %v137
      %v202 = vunpack.c.l.b16 %v138
      %v203 = vunpack.c.l.b16 %v139
      %v204 = vunpack.c.l.b16 %v140
      %v205 = vunpack.c.l.b16 %v141
      %v206 = vunpack.c.l.b16 %v142
      %v207 = vunpack.c.l.b16 %v143
      %v208 = vunpack.c.l.b16 %v144
      %v209 = vunpack.c.l.b16 %v145
      %v210 = vunpack.c.l.b16 %v146
      %v211 = vunpack.c.l.b16 %v147
      %v212 = vunpack.c.l.b16 %v148
      %v213 = vunpack.c.l.b16 %v149
      %v214 = vunpack.c.l.b16 %v150
      %v215 = vunpack.c.l.b16 %v151
      %v216 = vpack.c.b16 %v185, %v184
      %v217 = vpack.c.b16 %v187, %v186
      %v218 = vpack.c.b16 %v189, %v188
      %v219 = vpack.c.b16 %v191, %v190
      %v220 = vpack.c.b16 %v193, %v192
      %v221 = vpack.c.b16 %v195, %v194
      %v222 = vpack.c.b16 %v197, %v196
      %v223 = vpack.c.b16 %v199, %v198
      %v224 = vpack.c.b16 %v201, %v200
      %v225 = vpack.c.b16 %v203, %v202
      %v226 = vpack.c.b16 %v205, %v204
      %v227 = vpack.c.b16 %v207, %v206
      %v228 = vpack.c.b16 %v209, %v208
      %v229 = vpack.c.b16 %v211, %v210
      %v230 = vpack.c.b16 %v213, %v212
      %v231 = vpack.c.b16 %v215, %v214
      %248 = vmatprep.subr.bf16.mxu0 0
      %249 = vmatpush1.bf16.msra.mxu0 %v216
      %250 = vmatprep.subr.bf16.mxu0 0
      %251 = vmatpush1.bf16.msra.mxu0 %v217
      %252 = vmatprep.subr.bf16.mxu0 0
      %253 = vmatpush1.bf16.msra.mxu0 %v218
      %254 = vmatprep.subr.bf16.mxu0 0
      %255 = vmatpush1.bf16.msra.mxu0 %v219
      %256 = vmatprep.subr.bf16.mxu0 0
      %257 = vmatpush1.bf16.msra.mxu0 %v220
      %258 = vmatprep.subr.bf16.mxu0 0
      %259 = vmatpush1.bf16.msra.mxu0 %v221
      %260 = vmatprep.subr.bf16.mxu0 0
      %261 = vmatpush1.bf16.msra.mxu0 %v222
      %262 = vmatprep.subr.bf16.mxu0 0
      %263 = vmatpush1.bf16.msra.mxu0 %v223
      %264 = vmatprep.subr.bf16.mxu0 0
      %265 = vmatpush1.bf16.msra.mxu0 %v224
      %266 = vmatprep.subr.bf16.mxu0 0
      %267 = vmatpush1.bf16.msra.mxu0 %v225
      %268 = vmatprep.subr.bf16.mxu0 0
      %269 = vmatpush1.bf16.msra.mxu0 %v226
      %270 = vmatprep.subr.bf16.mxu0 0
      %271 = vmatpush1.bf16.msra.mxu0 %v227
      %272 = vmatprep.subr.bf16.mxu0 0
      %273 = vmatpush1.bf16.msra.mxu0 %v228
      %274 = vmatprep.subr.bf16.mxu0 0
      %275 = vmatpush1.bf16.msra.mxu0 %v229
      %276 = vmatprep.subr.bf16.mxu0 0
      %277 = vmatpush1.bf16.msra.mxu0 %v230
      %278 = vmatprep.subr.bf16.mxu0 0
      %279 = vmatpush1.bf16.msra.mxu0 %v231
      %280 = vmatprep.mubr.bf16.mxu0 %v113
      %281 = vmatmul.mubr.bf16.gmra.mrb[0].mxu0 %v112
      %v282 = vpop.f32.mrb[0].mxu0
      %v283 = vadd.f32 0.0, %v282
      %v284 = vpop.f32.mrb[0].mxu0
      %v285 = vpop.f32.mrb[0].mxu0
      %v286 = vadd.f32 0.0, %v285
      %v287 = vpop.f32.mrb[0].mxu0
      %288 = vmatprep.mubr.bf16.mxu0 %v115
      %289 = vmatmul.mubr.bf16.gmra.mrb[0].mxu0 %v114
      %v290 = vpop.f32.mrb[0].mxu0
      %v291 = vadd.f32 0.0, %v290
      %v292 = vpop.f32.mrb[0].mxu0
      %v293 = vpop.f32.mrb[0].mxu0
      %v294 = vadd.f32 0.0, %v293
      %v295 = vpop.f32.mrb[0].mxu0
      %296 = vmatprep.mubr.bf16.mxu0 %v117
      %297 = vmatmul.mubr.bf16.gmra.mrb[0].mxu0 %v116
      %v298 = vpop.f32.mrb[0].mxu0
      %v299 = vadd.f32 0.0, %v298
      %v300 = vpop.f32.mrb[0].mxu0
      %v301 = vpop.f32.mrb[0].mxu0
      %v302 = vadd.f32 0.0, %v301
      %v303 = vpop.f32.mrb[0].mxu0
      %304 = vmatprep.mubr.bf16.mxu0 %v119
      %305 = vmatmul.mubr.bf16.gmra.mrb[0].mxu0 %v118
      %v306 = vpop.f32.mrb[0].mxu0
      %v307 = vadd.f32 0.0, %v306
      %v308 = vpop.f32.mrb[0].mxu0
      %v309 = vpop.f32.mrb[0].mxu0
      %v310 = vadd.f32 0.0, %v309
      %v311 = vpop.f32.mrb[0].mxu0
      %312 = vdwg.mxu0
      %v313 = vld [vmem:[%s2] sm:$0xf]
      %v314 = vld [vmem:[%s2 + $0x4] sm:$0xf]
      %v315 = vld [vmem:[%s2 + $0x8] sm:$0xf]
      %v316 = vld [vmem:[%s2 + $0xc] sm:$0xf]
      %v317 = vld [vmem:[%s2 + $0x10] sm:$0xf]
      %v318 = vld [vmem:[%s2 + $0x14] sm:$0xf]
      %v319 = vld [vmem:[%s2 + $0x18] sm:$0xf]
      %v320 = vld [vmem:[%s2 + $0x1c] sm:$0xf]
      %v321 = vld [vmem:[%s2 + $0x20] sm:$0xf]
      %v322 = vld [vmem:[%s2 + $0x24] sm:$0xf]
      %v323 = vld [vmem:[%s2 + $0x28] sm:$0xf]
      %v324 = vld [vmem:[%s2 + $0x2c] sm:$0xf]
      %v325 = vld [vmem:[%s2 + $0x30] sm:$0xf]
      %v326 = vld [vmem:[%s2 + $0x34] sm:$0xf]
      %v327 = vld [vmem:[%s2 + $0x38] sm:$0xf]
      %v328 = vld [vmem:[%s2 + $0x3c] sm:$0xf]
      %v329 = vpack.c.bf16 %v283, %v283
      %v330 = vpack.c.bf16 %v286, %v286
      %v333 = vunpack.c.l.b16 %v315
      %v334 = vunpack.c.l.b16 %v316
      %v335 = vpack.c.b16 %v334, %v333
      %vm337 = vcmask 130048
      %v339 = vsel %vm337, %v330, 0
      %341 = vmatprep.subr.bf16.mxu0 0
      %342 = vmatpush1.bf16.msra.mxu0 %v335
      %343 = vmatprep.subr.bf16.mxu0 0
      %344 = vmatpush1.bf16.msra.mxu0 0
      %345 = vmatprep.subr.bf16.mxu0 0
      %346 = vmatpush1.bf16.msra.mxu0 0
      %347 = vmatprep.subr.bf16.mxu0 0
      %348 = vmatpush1.bf16.msra.mxu0 0
      %349 = vmatprep.subr.bf16.mxu0 0
      %350 = vmatpush1.bf16.msra.mxu0 0
      %351 = vmatprep.subr.bf16.mxu0 0
      %352 = vmatpush1.bf16.msra.mxu0 0
      %353 = vmatprep.subr.bf16.mxu0 0
      %354 = vmatpush1.bf16.msra.mxu0 0
      %355 = vmatprep.subr.bf16.mxu0 0
      %356 = vmatpush1.bf16.msra.mxu0 0
      %357 = vmatprep.subr.bf16.mxu0 0
      %358 = vmatpush1.bf16.msra.mxu0 0
      %359 = vmatprep.subr.bf16.mxu0 0
      %360 = vmatpush1.bf16.msra.mxu0 0
      %361 = vmatprep.subr.bf16.mxu0 0
      %362 = vmatpush1.bf16.msra.mxu0 0
      %363 = vmatprep.subr.bf16.mxu0 0
      %364 = vmatpush1.bf16.msra.mxu0 0
      %365 = vmatprep.subr.bf16.mxu0 0
      %366 = vmatpush1.bf16.msra.mxu0 0
      %367 = vmatprep.subr.bf16.mxu0 0
      %368 = vmatpush1.bf16.msra.mxu0 0
      %369 = vmatprep.subr.bf16.mxu0 0
      %370 = vmatpush1.bf16.msra.mxu0 0
      %371 = vmatprep.subr.bf16.mxu0 0
      %372 = vmatpush1.bf16.msra.mxu0 0
      %373 = vmatprep.mubr.bf16.mxu0 0
      %374 = vmatmul.mubr.bf16.gmra.mrb[0].mxu0 %v339
      %v375 = vpop.f32.mrb[0].mxu0
      %v376 = vadd.f32 0.0, %v375
      %v377 = vpop.f32.mrb[0].mxu0
      %v378 = vpop.f32.mrb[0].mxu0
      %v379 = vpop.f32.mrb[0].mxu0
      %380 = vdwg.mxu0
      %v383 = vunpack.c.l.b16 %v313
      %v384 = vunpack.c.l.b16 %v314
      %v385 = vpack.c.b16 %v384, %v383
      %v388 = vsel %vm337, %v329, 0
      %390 = vmatprep.subr.bf16.mxu0 0
      %391 = vmatpush1.bf16.msra.mxu0 %v385
      %392 = vmatprep.subr.bf16.mxu0 0
      %393 = vmatpush1.bf16.msra.mxu0 0
      %394 = vmatprep.subr.bf16.mxu0 0
      %395 = vmatpush1.bf16.msra.mxu0 0
      %396 = vmatprep.subr.bf16.mxu0 0
      %397 = vmatpush1.bf16.msra.mxu0 0
      %398 = vmatprep.subr.bf16.mxu0 0
      %399 = vmatpush1.bf16.msra.mxu0 0
      %400 = vmatprep.subr.bf16.mxu0 0
      %401 = vmatpush1.bf16.msra.mxu0 0
      %402 = vmatprep.subr.bf16.mxu0 0
      %403 = vmatpush1.bf16.msra.mxu0 0
      %404 = vmatprep.subr.bf16.mxu0 0
      %405 = vmatpush1.bf16.msra.mxu0 0
      %406 = vmatprep.subr.bf16.mxu0 0
      %407 = vmatpush1.bf16.msra.mxu0 0
      %408 = vmatprep.subr.bf16.mxu0 0
      %409 = vmatpush1.bf16.msra.mxu0 0
      %410 = vmatprep.subr.bf16.mxu0 0
      %411 = vmatpush1.bf16.msra.mxu0 0
      %412 = vmatprep.subr.bf16.mxu0 0
      %413 = vmatpush1.bf16.msra.mxu0 0
      %414 = vmatprep.subr.bf16.mxu0 0
      %415 = vmatpush1.bf16.msra.mxu0 0
      %416 = vmatprep.subr.bf16.mxu0 0
      %417 = vmatpush1.bf16.msra.mxu0 0
      %418 = vmatprep.subr.bf16.mxu0 0
      %419 = vmatpush1.bf16.msra.mxu0 0
      %420 = vmatprep.subr.bf16.mxu0 0
      %421 = vmatpush1.bf16.msra.mxu0 0
      %422 = vmatprep.mubr.bf16.mxu0 0
      %423 = vmatmul.mubr.bf16.gmra.mrb[0].mxu0 %v388
      %v424 = vpop.f32.mrb[0].mxu0
      %v425 = vadd.f32 %v376, %v424
      %v426 = vpop.f32.mrb[0].mxu0
      %v427 = vpop.f32.mrb[0].mxu0
      %v428 = vpop.f32.mrb[0].mxu0
      %429 = vdwg.mxu0
      %v430 = vpack.c.bf16 %v291, %v291
      %v433 = vunpack.c.l.b16 %v317
      %v434 = vunpack.c.l.b16 %v318
      %v435 = vpack.c.b16 %v434, %v433
      %v438 = vsel %vm337, %v430, 0
      %440 = vmatprep.subr.bf16.mxu0 0
      %441 = vmatpush1.bf16.msra.mxu0 %v435
      %442 = vmatprep.subr.bf16.mxu0 0
      %443 = vmatpush1.bf16.msra.mxu0 0
      %444 = vmatprep.subr.bf16.mxu0 0
      %445 = vmatpush1.bf16.msra.mxu0 0
      %446 = vmatprep.subr.bf16.mxu0 0
      %447 = vmatpush1.bf16.msra.mxu0 0
      %448 = vmatprep.subr.bf16.mxu0 0
      %449 = vmatpush1.bf16.msra.mxu0 0
      %450 = vmatprep.subr.bf16.mxu0 0
      %451 = vmatpush1.bf16.msra.mxu0 0
      %452 = vmatprep.subr.bf16.mxu0 0
      %453 = vmatpush1.bf16.msra.mxu0 0
      %454 = vmatprep.subr.bf16.mxu0 0
      %455 = vmatpush1.bf16.msra.mxu0 0
      %456 = vmatprep.subr.bf16.mxu0 0
      %457 = vmatpush1.bf16.msra.mxu0 0
      %458 = vmatprep.subr.bf16.mxu0 0
      %459 = vmatpush1.bf16.msra.mxu0 0
      %460 = vmatprep.subr.bf16.mxu0 0
      %461 = vmatpush1.bf16.msra.mxu0 0
      %462 = vmatprep.subr.bf16.mxu0 0
      %463 = vmatpush1.bf16.msra.mxu0 0
      %464 = vmatprep.subr.bf16.mxu0 0
      %465 = vmatpush1.bf16.msra.mxu0 0
      %466 = vmatprep.subr.bf16.mxu0 0
      %467 = vmatpush1.bf16.msra.mxu0 0
      %468 = vmatprep.subr.bf16.mxu0 0
      %469 = vmatpush1.bf16.msra.mxu0 0
      %470 = vmatprep.subr.bf16.mxu0 0
      %471 = vmatpush1.bf16.msra.mxu0 0
      %472 = vmatprep.mubr.bf16.mxu0 0
      %473 = vmatmul.mubr.bf16.gmra.mrb[0].mxu0 %v438
      %v474 = vpop.f32.mrb[0].mxu0
      %v475 = vadd.f32 0.0, %v474
      %v476 = vpop.f32.mrb[0].mxu0
      %v477 = vpop.f32.mrb[0].mxu0
      %v478 = vpop.f32.mrb[0].mxu0
      %479 = vdwg.mxu0
      %v480 = vadd.f32 %v425, %v475
      %v481 = vpack.c.bf16 %v294, %v294
      %v484 = vunpack.c.l.b16 %v319
      %v485 = vunpack.c.l.b16 %v320
      %v486 = vpack.c.b16 %v485, %v484
      %v489 = vsel %vm337, %v481, 0
      %491 = vmatprep.subr.bf16.mxu0 0
      %492 = vmatpush1.bf16.msra.mxu0 %v486
      %493 = vmatprep.subr.bf16.mxu0 0
      %494 = vmatpush1.bf16.msra.mxu0 0
      %495 = vmatprep.subr.bf16.mxu0 0
      %496 = vmatpush1.bf16.msra.mxu0 0
      %497 = vmatprep.subr.bf16.mxu0 0
      %498 = vmatpush1.bf16.msra.mxu0 0
      %499 = vmatprep.subr.bf16.mxu0 0
      %500 = vmatpush1.bf16.msra.mxu0 0
      %501 = vmatprep.subr.bf16.mxu0 0
      %502 = vmatpush1.bf16.msra.mxu0 0
      %503 = vmatprep.subr.bf16.mxu0 0
      %504 = vmatpush1.bf16.msra.mxu0 0
      %505 = vmatprep.subr.bf16.mxu0 0
      %506 = vmatpush1.bf16.msra.mxu0 0
      %507 = vmatprep.subr.bf16.mxu0 0
      %508 = vmatpush1.bf16.msra.mxu0 0
      %509 = vmatprep.subr.bf16.mxu0 0
      %510 = vmatpush1.bf16.msra.mxu0 0
      %511 = vmatprep.subr.bf16.mxu0 0
      %512 = vmatpush1.bf16.msra.mxu0 0
      %513 = vmatprep.subr.bf16.mxu0 0
      %514 = vmatpush1.bf16.msra.mxu0 0
      %515 = vmatprep.subr.bf16.mxu0 0
      %516 = vmatpush1.bf16.msra.mxu0 0
      %517 = vmatprep.subr.bf16.mxu0 0
      %518 = vmatpush1.bf16.msra.mxu0 0
      %519 = vmatprep.subr.bf16.mxu0 0
      %520 = vmatpush1.bf16.msra.mxu0 0
      %521 = vmatprep.subr.bf16.mxu0 0
      %522 = vmatpush1.bf16.msra.mxu0 0
      %523 = vmatprep.mubr.bf16.mxu0 0
      %524 = vmatmul.mubr.bf16.gmra.mrb[0].mxu0 %v489
      %v525 = vpop.f32.mrb[0].mxu0
      %v526 = vadd.f32 0.0, %v525
      %v527 = vpop.f32.mrb[0].mxu0
      %v528 = vpop.f32.mrb[0].mxu0
      %v529 = vpop.f32.mrb[0].mxu0
      %530 = vdwg.mxu0
      %v531 = vadd.f32 %v480, %v526
      %v532 = vpack.c.bf16 %v299, %v299
      %v535 = vunpack.c.l.b16 %v321
      %v536 = vunpack.c.l.b16 %v322
      %v537 = vpack.c.b16 %v536, %v535
      %v540 = vsel %vm337, %v532, 0
      %542 = vmatprep.subr.bf16.mxu0 0
      %543 = vmatpush1.bf16.msra.mxu0 %v537
      %544 = vmatprep.subr.bf16.mxu0 0
      %545 = vmatpush1.bf16.msra.mxu0 0
      %546 = vmatprep.subr.bf16.mxu0 0
      %547 = vmatpush1.bf16.msra.mxu0 0
      %548 = vmatprep.subr.bf16.mxu0 0
      %549 = vmatpush1.bf16.msra.mxu0 0
      %550 = vmatprep.subr.bf16.mxu0 0
      %551 = vmatpush1.bf16.msra.mxu0 0
      %552 = vmatprep.subr.bf16.mxu0 0
      %553 = vmatpush1.bf16.msra.mxu0 0
      %554 = vmatprep.subr.bf16.mxu0 0
      %555 = vmatpush1.bf16.msra.mxu0 0
      %556 = vmatprep.subr.bf16.mxu0 0
      %557 = vmatpush1.bf16.msra.mxu0 0
      %558 = vmatprep.subr.bf16.mxu0 0
      %559 = vmatpush1.bf16.msra.mxu0 0
      %560 = vmatprep.subr.bf16.mxu0 0
      %561 = vmatpush1.bf16.msra.mxu0 0
      %562 = vmatprep.subr.bf16.mxu0 0
      %563 = vmatpush1.bf16.msra.mxu0 0
      %564 = vmatprep.subr.bf16.mxu0 0
      %565 = vmatpush1.bf16.msra.mxu0 0
      %566 = vmatprep.subr.bf16.mxu0 0
      %567 = vmatpush1.bf16.msra.mxu0 0
      %568 = vmatprep.subr.bf16.mxu0 0
      %569 = vmatpush1.bf16.msra.mxu0 0
      %570 = vmatprep.subr.bf16.mxu0 0
      %571 = vmatpush1.bf16.msra.mxu0 0
      %572 = vmatprep.subr.bf16.mxu0 0
      %573 = vmatpush1.bf16.msra.mxu0 0
      %574 = vmatprep.mubr.bf16.mxu0 0
      %575 = vmatmul.mubr.bf16.gmra.mrb[0].mxu0 %v540
      %v576 = vpop.f32.mrb[0].mxu0
      %v577 = vadd.f32 0.0, %v576
      %v578 = vpop.f32.mrb[0].mxu0
      %v579 = vpop.f32.mrb[0].mxu0
      %v580 = vpop.f32.mrb[0].mxu0
      %581 = vdwg.mxu0
      %v582 = vadd.f32 %v531, %v577
      %v583 = vpack.c.bf16 %v302, %v302
      %v586 = vunpack.c.l.b16 %v323
      %v587 = vunpack.c.l.b16 %v324
      %v588 = vpack.c.b16 %v587, %v586
      %v591 = vsel %vm337, %v583, 0
      %593 = vmatprep.subr.bf16.mxu0 0
      %594 = vmatpush1.bf16.msra.mxu0 %v588
      %595 = vmatprep.subr.bf16.mxu0 0
      %596 = vmatpush1.bf16.msra.mxu0 0
      %597 = vmatprep.subr.bf16.mxu0 0
      %598 = vmatpush1.bf16.msra.mxu0 0
      %599 = vmatprep.subr.bf16.mxu0 0
      %600 = vmatpush1.bf16.msra.mxu0 0
      %601 = vmatprep.subr.bf16.mxu0 0
      %602 = vmatpush1.bf16.msra.mxu0 0
      %603 = vmatprep.subr.bf16.mxu0 0
      %604 = vmatpush1.bf16.msra.mxu0 0
      %605 = vmatprep.subr.bf16.mxu0 0
      %606 = vmatpush1.bf16.msra.mxu0 0
      %607 = vmatprep.subr.bf16.mxu0 0
      %608 = vmatpush1.bf16.msra.mxu0 0
      %609 = vmatprep.subr.bf16.mxu0 0
      %610 = vmatpush1.bf16.msra.mxu0 0
      %611 = vmatprep.subr.bf16.mxu0 0
      %612 = vmatpush1.bf16.msra.mxu0 0
      %613 = vmatprep.subr.bf16.mxu0 0
      %614 = vmatpush1.bf16.msra.mxu0 0
      %615 = vmatprep.subr.bf16.mxu0 0
      %616 = vmatpush1.bf16.msra.mxu0 0
      %617 = vmatprep.subr.bf16.mxu0 0
      %618 = vmatpush1.bf16.msra.mxu0 0
      %619 = vmatprep.subr.bf16.mxu0 0
      %620 = vmatpush1.bf16.msra.mxu0 0
      %621 = vmatprep.subr.bf16.mxu0 0
      %622 = vmatpush1.bf16.msra.mxu0 0
      %623 = vmatprep.subr.bf16.mxu0 0
      %624 = vmatpush1.bf16.msra.mxu0 0
      %625 = vmatprep.mubr.bf16.mxu0 0
      %626 = vmatmul.mubr.bf16.gmra.mrb[0].mxu0 %v591
      %v627 = vpop.f32.mrb[0].mxu0
      %v628 = vadd.f32 0.0, %v627
      %v629 = vpop.f32.mrb[0].mxu0
      %v630 = vpop.f32.mrb[0].mxu0
      %v631 = vpop.f32.mrb[0].mxu0
      %632 = vdwg.mxu0
      %v633 = vadd.f32 %v582, %v628
      %v634 = vpack.c.bf16 %v307, %v307
      %v637 = vunpack.c.l.b16 %v325
      %v638 = vunpack.c.l.b16 %v326
      %v639 = vpack.c.b16 %v638, %v637
      %v642 = vsel %vm337, %v634, 0
      %644 = vmatprep.subr.bf16.mxu0 0
      %645 = vmatpush1.bf16.msra.mxu0 %v639
      %646 = vmatprep.subr.bf16.mxu0 0
      %647 = vmatpush1.bf16.msra.mxu0 0
      %648 = vmatprep.subr.bf16.mxu0 0
      %649 = vmatpush1.bf16.msra.mxu0 0
      %650 = vmatprep.subr.bf16.mxu0 0
      %651 = vmatpush1.bf16.msra.mxu0 0
      %652 = vmatprep.subr.bf16.mxu0 0
      %653 = vmatpush1.bf16.msra.mxu0 0
      %654 = vmatprep.subr.bf16.mxu0 0
      %655 = vmatpush1.bf16.msra.mxu0 0
      %656 = vmatprep.subr.bf16.mxu0 0
      %657 = vmatpush1.bf16.msra.mxu0 0
      %658 = vmatprep.subr.bf16.mxu0 0
      %659 = vmatpush1.bf16.msra.mxu0 0
      %660 = vmatprep.subr.bf16.mxu0 0
      %661 = vmatpush1.bf16.msra.mxu0 0
      %662 = vmatprep.subr.bf16.mxu0 0
      %663 = vmatpush1.bf16.msra.mxu0 0
      %664 = vmatprep.subr.bf16.mxu0 0
      %665 = vmatpush1.bf16.msra.mxu0 0
      %666 = vmatprep.subr.bf16.mxu0 0
      %667 = vmatpush1.bf16.msra.mxu0 0
      %668 = vmatprep.subr.bf16.mxu0 0
      %669 = vmatpush1.bf16.msra.mxu0 0
      %670 = vmatprep.subr.bf16.mxu0 0
      %671 = vmatpush1.bf16.msra.mxu0 0
      %672 = vmatprep.subr.bf16.mxu0 0
      %673 = vmatpush1.bf16.msra.mxu0 0
      %674 = vmatprep.subr.bf16.mxu0 0
      %675 = vmatpush1.bf16.msra.mxu0 0
      %676 = vmatprep.mubr.bf16.mxu0 0
      %677 = vmatmul.mubr.bf16.gmra.mrb[0].mxu0 %v642
      %v678 = vpop.f32.mrb[0].mxu0
      %v679 = vadd.f32 0.0, %v678
      %v680 = vpop.f32.mrb[0].mxu0
      %v681 = vpop.f32.mrb[0].mxu0
      %v682 = vpop.f32.mrb[0].mxu0
      %683 = vdwg.mxu0
      %v684 = vadd.f32 %v633, %v679
      %v685 = vpack.c.bf16 %v310, %v310
      %v688 = vunpack.c.l.b16 %v327
      %v689 = vunpack.c.l.b16 %v328
      %v690 = vpack.c.b16 %v689, %v688
      %v693 = vsel %vm337, %v685, 0
      %695 = vmatprep.subr.bf16.mxu0 0
      %696 = vmatpush1.bf16.msra.mxu0 %v690
      %697 = vmatprep.subr.bf16.mxu0 0
      %698 = vmatpush1.bf16.msra.mxu0 0
      %699 = vmatprep.subr.bf16.mxu0 0
      %700 = vmatpush1.bf16.msra.mxu0 0
      %701 = vmatprep.subr.bf16.mxu0 0
      %702 = vmatpush1.bf16.msra.mxu0 0
      %703 = vmatprep.subr.bf16.mxu0 0
      %704 = vmatpush1.bf16.msra.mxu0 0
      %705 = vmatprep.subr.bf16.mxu0 0
      %706 = vmatpush1.bf16.msra.mxu0 0
      %707 = vmatprep.subr.bf16.mxu0 0
      %708 = vmatpush1.bf16.msra.mxu0 0
      %709 = vmatprep.subr.bf16.mxu0 0
      %710 = vmatpush1.bf16.msra.mxu0 0
      %711 = vmatprep.subr.bf16.mxu0 0
      %712 = vmatpush1.bf16.msra.mxu0 0
      %713 = vmatprep.subr.bf16.mxu0 0
      %714 = vmatpush1.bf16.msra.mxu0 0
      %715 = vmatprep.subr.bf16.mxu0 0
      %716 = vmatpush1.bf16.msra.mxu0 0
      %717 = vmatprep.subr.bf16.mxu0 0
      %718 = vmatpush1.bf16.msra.mxu0 0
      %719 = vmatprep.subr.bf16.mxu0 0
      %720 = vmatpush1.bf16.msra.mxu0 0
      %721 = vmatprep.subr.bf16.mxu0 0
      %722 = vmatpush1.bf16.msra.mxu0 0
      %723 = vmatprep.subr.bf16.mxu0 0
      %724 = vmatpush1.bf16.msra.mxu0 0
      %725 = vmatprep.subr.bf16.mxu0 0
      %726 = vmatpush1.bf16.msra.mxu0 0
      %727 = vmatprep.mubr.bf16.mxu0 0
      %728 = vmatmul.mubr.bf16.gmra.mrb[0].mxu0 %v693
      %v729 = vpop.f32.mrb[0].mxu0
      %v730 = vadd.f32 0.0, %v729
      %v731 = vpop.f32.mrb[0].mxu0
      %v732 = vpop.f32.mrb[0].mxu0
      %v733 = vpop.f32.mrb[0].mxu0
      %734 = vdwg.mxu0
      %v735 = vadd.f32 %v684, %v730
      %v736 = vld [vmem:[%s3] sm:$0x1]
      %v738 = vlaneseq
      %v739 = vshrl.u32 %v738, 7
      %v740 = vsub.s32 0, %v739
      %v741 = vrot.slane %v736, %v740
      %v743 = vadd.f32 %v735, %v741
      %v744 = vtanh.pop %v743
      %v745 = vpack.c.bf16 %v744, %v744
      %746 = vst [vmem:[#allocation2] sm:$0xf] %v745
    $region29: #{next_word_forward.1} parent=1 // pred_fallthru
      _
    %v747 = vld [vmem:[#allocation2] sm:$0xf]
    %v748 = vld [vmem:[%s4] sm:$0xff]
    %v749 = vld [vmem:[%s4 + $0x8] sm:$0xff]
    %v750 = vld [vmem:[%s4 + $0x10] sm:$0xff]
    %v751 = vld [vmem:[%s4 + $0x18] sm:$0xff]
    %v752 = vld [vmem:[%s4 + $0x20] sm:$0xff]
    %v753 = vld [vmem:[%s4 + $0x28] sm:$0xff]
    %v754 = vld [vmem:[%s4 + $0x30] sm:$0xff]
    %v755 = vld [vmem:[%s4 + $0x38] sm:$0xff]
    %v756 = vld [vmem:[%s4 + $0x40] sm:$0xff]
    %v757 = vld [vmem:[%s4 + $0x48] sm:$0xff]
    %v758 = vld [vmem:[%s4 + $0x50] sm:$0xff]
    %v759 = vld [vmem:[%s4 + $0x58] sm:$0xff]
    %v760 = vld [vmem:[%s4 + $0x60] sm:$0xff]
    %v761 = vld [vmem:[%s4 + $0x68] sm:$0xff]
    %v762 = vld [vmem:[%s4 + $0x70] sm:$0xff]
    %v763 = vld [vmem:[%s4 + $0x78] sm:$0xff]
    %v764 = vld [vmem:[%s5] sm:$0x3]
    %v766 = vlaneseq
    %v767 = vshrl.u32 %v766, 7
    %v768 = vsub.s32 0, %v767
    %v769 = vrot.slane %v764, %v768
    %v770 = vlaneseq
    %v771 = vshrl.u32 %v770, 7
    %v772 = vsub.s32 1, %v771
    %v773 = vrot.slane %v764, %v772
    %v792 = vunpack.c.l.b16 %v748
    %v793 = vunpack.c.h.b16 %v748
    %v794 = vunpack.c.l.b16 %v749
    %v795 = vunpack.c.h.b16 %v749
    %v796 = vunpack.c.l.b16 %v750
    %v797 = vunpack.c.h.b16 %v750
    %v798 = vunpack.c.l.b16 %v751
    %v799 = vunpack.c.h.b16 %v751
    %v800 = vunpack.c.l.b16 %v752
    %v801 = vunpack.c.h.b16 %v752
    %v802 = vunpack.c.l.b16 %v753
    %v803 = vunpack.c.h.b16 %v753
    %v804 = vunpack.c.l.b16 %v754
    %v805 = vunpack.c.h.b16 %v754
    %v806 = vunpack.c.l.b16 %v755
    %v807 = vunpack.c.h.b16 %v755
    %v808 = vunpack.c.l.b16 %v756
    %v809 = vunpack.c.h.b16 %v756
    %v810 = vunpack.c.l.b16 %v757
    %v811 = vunpack.c.h.b16 %v757
    %v812 = vunpack.c.l.b16 %v758
    %v813 = vunpack.c.h.b16 %v758
    %v814 = vunpack.c.l.b16 %v759
    %v815 = vunpack.c.h.b16 %v759
    %v816 = vunpack.c.l.b16 %v760
    %v817 = vunpack.c.h.b16 %v760
    %v818 = vunpack.c.l.b16 %v761
    %v819 = vunpack.c.h.b16 %v761
    %v820 = vunpack.c.l.b16 %v762
    %v821 = vunpack.c.h.b16 %v762
    %v822 = vunpack.c.l.b16 %v763
    %v823 = vunpack.c.h.b16 %v763
    %v824 = vpack.c.b16 %v794, %v792
    %v825 = vpack.c.b16 %v795, %v793
    %v826 = vpack.c.b16 %v798, %v796
    %v827 = vpack.c.b16 %v799, %v797
    %v828 = vpack.c.b16 %v802, %v800
    %v829 = vpack.c.b16 %v803, %v801
    %v830 = vpack.c.b16 %v806, %v804
    %v831 = vpack.c.b16 %v807, %v805
    %v832 = vpack.c.b16 %v810, %v808
    %v833 = vpack.c.b16 %v811, %v809
    %v834 = vpack.c.b16 %v814, %v812
    %v835 = vpack.c.b16 %v815, %v813
    %v836 = vpack.c.b16 %v818, %v816
    %v837 = vpack.c.b16 %v819, %v817
    %v838 = vpack.c.b16 %v822, %v820
    %v839 = vpack.c.b16 %v823, %v821
    %856 = vmatprep.subr.bf16.mxu0 %v825
    %857 = vmatpush1.bf16.msra.mxu0 %v824
    %858 = vmatprep.subr.bf16.mxu0 %v827
    %859 = vmatpush1.bf16.msra.mxu0 %v826
    %860 = vmatprep.subr.bf16.mxu0 %v829
    %861 = vmatpush1.bf16.msra.mxu0 %v828
    %862 = vmatprep.subr.bf16.mxu0 %v831
    %863 = vmatpush1.bf16.msra.mxu0 %v830
    %864 = vmatprep.subr.bf16.mxu0 %v833
    %865 = vmatpush1.bf16.msra.mxu0 %v832
    %866 = vmatprep.subr.bf16.mxu0 %v835
    %867 = vmatpush1.bf16.msra.mxu0 %v834
    %868 = vmatprep.subr.bf16.mxu0 %v837
    %869 = vmatpush1.bf16.msra.mxu0 %v836
    %870 = vmatprep.subr.bf16.mxu0 %v839
    %871 = vmatpush1.bf16.msra.mxu0 %v838
    %872 = vmatprep.subr.bf16.mxu0 0
    %873 = vmatpush1.bf16.msra.mxu0 0
    %874 = vmatprep.subr.bf16.mxu0 0
    %875 = vmatpush1.bf16.msra.mxu0 0
    %876 = vmatprep.subr.bf16.mxu0 0
    %877 = vmatpush1.bf16.msra.mxu0 0
    %878 = vmatprep.subr.bf16.mxu0 0
    %879 = vmatpush1.bf16.msra.mxu0 0
    %880 = vmatprep.subr.bf16.mxu0 0
    %881 = vmatpush1.bf16.msra.mxu0 0
    %882 = vmatprep.subr.bf16.mxu0 0
    %883 = vmatpush1.bf16.msra.mxu0 0
    %884 = vmatprep.subr.bf16.mxu0 0
    %885 = vmatpush1.bf16.msra.mxu0 0
    %886 = vmatprep.subr.bf16.mxu0 0
    %887 = vmatpush1.bf16.msra.mxu0 0
    %888 = vmatprep.mubr.bf16.mxu0 0
    %889 = vmatmul.mubr.bf16.gmra.mrb[0].mxu0 %v747
    %v890 = vpop.f32.mrb[0].mxu0
    %v891 = vadd.f32 %v769, %v890
    %v892 = vpop.f32.mrb[0].mxu0
    %v893 = vadd.f32 %v773, %v892
    %v894 = vpop.f32.mrb[0].mxu0
    %v895 = vpop.f32.mrb[0].mxu0
    %896 = vdwg.mxu0
    %897 = vst [vmem:[#allocation3] sm:$0xff] %v891
    %898 = vst [vmem:[#allocation3 + $0x8] sm:$0xff] %v893
    // Predicated region
    $region30: #{next_word_forward.1} parent=1 // pred_check
      _
    $region31: #{next_word_forward.1} parent=1 // pred_check_branch
      %900 = sbr.rel (0) target = $region33
    $region32: #{next_word_forward.1} parent=1 // pred_region
      %s902 = ssub.s32 256, 256
      %903 = vsyncadd [#allocation4], %s902
      %s905 = sshll.u32 [#allocation3], 4
      %s906 = int_to_ptr.vmem [resolvable:$true] %s905
      %908 = dma.vmem_to_hbm [thread:$0]  %s906, 256, %s6, [#allocation4]
    $region33: #{next_word_forward.1} parent=1 // pred_fallthru
      _
    // Predicated region
    $region34: #{next_word_forward.1} parent=1 // pred_check
      _
    $region35: #{next_word_forward.1} parent=1 // pred_check_branch
      %910 = sbr.rel (0) target = $region37
    $region36: #{next_word_forward.1} parent=1 // pred_region
      %911 = dma.done [#allocation4], 256
    $region37: #{next_word_forward.1} parent=1 // pred_fallthru
      _
    %912 = vsyncpa [#allocation4], 1

</llo_original>
